<compile_context>
chip_gen: v7x
topology: tpu7x:2x2x1
jax: 0.10.0
libtpu: 0.0.40
codegen_flags: <defaults>
</compile_context>

<pallas_src>
from functools import partial

import jax
import jax.numpy as jnp
from jax.experimental import pallas as pl
from jax.experimental.pallas import tpu as pltpu


# ----------------------------------------------------------------------------
# Kernel
# ----------------------------------------------------------------------------
def _landscape_kernel(s_ref, w_ref, i_ref, g_ref, x_ref, o_ref):
    # MXU matmul: cast the f32-streamed s tile to the weight dtype (bf16)
    # in-kernel; f32 accumulation.  The cast rides the VPU slot under the MXU.
    sw = jnp.dot(s_ref[...].astype(w_ref.dtype), w_ref[...],
                 preferred_element_type=jnp.float32)
    # Elementwise tail in f32: + I (broadcast over batch) - g * x.
    o_ref[...] = sw + i_ref[...] - g_ref[...] * x_ref[...]


# ----------------------------------------------------------------------------
# Helpers
# ----------------------------------------------------------------------------
def _vmem_capacity_bytes():
    """Per-TensorCore VMEM capacity (generation-aware), with a safe default."""
    try:
        return int(pltpu.get_tpu_info().vmem_capacity_bytes)
    except Exception:
        return 64 << 20  # conservative: v7x per-TC VMEM


def _pick_batch_tiling(B, *, align=16, min_steps=4, max_tile=512):
    """Return (tile_b, padded_B).

    Guarantees (when B allows): >= min_steps grid steps so BlockSpec
    double-buffering actually overlaps DMA with compute, an even number of
    steps so v7x's 2 TensorCores split the 'parallel' batch axis evenly, and
    tile_b a multiple of 16 rows (native bf16 sublane tile), capped by
    max_tile (which the caller derives from the VMEM budget).
    """
    max_tile = max(align, (max_tile // align) * align)
    if B <= align:
        return B, B  # tiny batch: single full-extent block (always legal)
    tile = min(max_tile, max(align, (B // min_steps // align) * align))
    steps = -(-B // tile)
    # Prefer an even step count (v7x dual-TC); shrink tile if needed.
    while steps % 2 == 1 and steps > 1 and tile > align:
        tile -= align
        steps = -(-B // tile)
    return tile, steps * tile


def prepare_landscape_params(U, V, I, g, *, matmul_dtype=jnp.bfloat16):
    """One-time (per parameter update) prep.

    Fuses W = U @ V, casts W to the matmul dtype, reshapes/casts I and g, and
    pads the feature dim to a lane-dense multiple of 128.  Keeping this out of
    the per-call forward removes a full HBM pass over W on every invocation.
    """
    n = U.shape[0]
    assert V.shape[1] == n
    W = jnp.dot(U.astype(jnp.float32), V.astype(jnp.float32),
                preferred_element_type=jnp.float32)
    I2 = jnp.asarray(I, jnp.float32).reshape(1, n)
    g2 = jnp.asarray(g, jnp.float32).reshape(1, n)

    n_pad = ((n + 127) // 128) * 128
    if n_pad != n:
        pad = n_pad - n
        W = jnp.pad(W, ((0, pad), (0, pad)))
        I2 = jnp.pad(I2, ((0, 0), (0, pad)))
        g2 = jnp.pad(g2, ((0, 0), (0, pad)))
    return {"W": W.astype(matmul_dtype), "I": I2, "g": g2, "n": n}


# ----------------------------------------------------------------------------
# Forward
# ----------------------------------------------------------------------------
@partial(jax.jit, static_argnames=("single_buffer_resident",))
def _forward_impl(s, x, W, I2, g2, *, single_buffer_resident=False):
    B, n = s.shape
    n_pad = W.shape[0]
    assert n_pad % 128 == 0 and n_pad >= n

    s = s.astype(jnp.float32)
    x = x.astype(jnp.float32)
    if n_pad != n:  # keep streamed blocks / output lane-dense
        s = jnp.pad(s, ((0, 0), (0, n_pad - n)))
        x = jnp.pad(x, ((0, 0), (0, n_pad - n)))

    # ---- generation-aware VMEM budget & batch tiling ------------------------
    cap = _vmem_capacity_bytes()
    w_bufs = 1 if single_buffer_resident else 2
    resident_bytes = (w_bufs * W.size * W.dtype.itemsize
                      + w_bufs * (I2.size + g2.size) * 4)
    stream_budget = int(0.8 * cap) - resident_bytes - (2 << 20)
    per_row_bytes = 2 * n_pad * (4 + 4 + 4)  # dbl-buffered s/x/out rows (f32)
    max_tile_vmem = 16
    if stream_budget > 0:
        max_tile_vmem = max(16, (stream_budget // per_row_bytes) // 16 * 16)
    tile_b, B_pad = _pick_batch_tiling(
        B, align=16, min_steps=4, max_tile=min(512, max_tile_vmem))
    if B_pad != B:
        s = jnp.pad(s, ((0, B_pad - B), (0, 0)))
        x = jnp.pad(x, ((0, B_pad - B), (0, 0)))
    num_tiles = B_pad // tile_b

    vmem_limit = int(min(0.8 * cap, 100 << 20))
    vmem_limit = max(vmem_limit, 16 << 20)

    bytes_accessed = (s.size * 4 + x.size * 4 + B_pad * n_pad * 4
                      + W.size * W.dtype.itemsize + (I2.size + g2.size) * 4)
    cost = pl.CostEstimate(flops=2 * B_pad * n_pad * n_pad,
                           transcendentals=0,
                           bytes_accessed=int(bytes_accessed))

    # Grid-invariant operands: request single buffering (halves their VMEM).
    res_kw = {"pipeline_mode": pl.Buffered(1)} if single_buffer_resident else {}

    out = pl.pallas_call(
        _landscape_kernel,
        out_shape=jax.ShapeDtypeStruct((B_pad, n_pad), jnp.float32),
        grid=(num_tiles,),
        in_specs=[
            pl.BlockSpec((tile_b, n_pad), lambda i: (i, 0)),            # s (stream)
            pl.BlockSpec((n_pad, n_pad), lambda i: (0, 0), **res_kw),   # W (resident)
            pl.BlockSpec((1, n_pad), lambda i: (0, 0), **res_kw),       # I (resident)
            pl.BlockSpec((1, n_pad), lambda i: (0, 0), **res_kw),       # g (resident)
            pl.BlockSpec((tile_b, n_pad), lambda i: (i, 0)),            # x (stream)
        ],
        out_specs=pl.BlockSpec((tile_b, n_pad), lambda i: (i, 0)),
        compiler_params=pltpu.CompilerParams(
            dimension_semantics=("parallel",),  # v7x: shard batch over 2 TCs
            vmem_limit_bytes=vmem_limit,
        ),
        cost_estimate=cost,
    )(s, W, I2, g2, x)

    if B_pad != B or n_pad != n:
        out = out[:B, :n]
    return out


_RESIDENT_SINGLE_BUFFER = None  # tri-state: None = not probed yet


def optimizer_landscape_forward(s, x, params):
    """out = s @ W + I - g * x   with W/I/g prepped by prepare_landscape_params."""
    global _RESIDENT_SINGLE_BUFFER
    W, I2, g2 = params["W"], params["I"], params["g"]
    if _RESIDENT_SINGLE_BUFFER is None:
        if not hasattr(pl, "Buffered"):
            _RESIDENT_SINGLE_BUFFER = False
        else:
            try:
                out = _forward_impl(s, x, W, I2, g2,
                                    single_buffer_resident=True)
                out = jax.block_until_ready(out)
                _RESIDENT_SINGLE_BUFFER = True
                return out
            except Exception:
                # Fall back to default double-buffered resident operands.
                _RESIDENT_SINGLE_BUFFER = False
    return _forward_impl(s, x, W, I2, g2,
                         single_buffer_resident=_RESIDENT_SINGLE_BUFFER)


# ----------------------------------------------------------------------------
# Demo / self-check
# ----------------------------------------------------------------------------
def make_sparse_mask(key, rows, cols, frac, axis):
    """Mimic init_sparse_mask: along `axis`, set 20% of entries to 1 per line."""
    nsel = int(frac * (rows if axis == 0 else cols))
    mask = jnp.zeros((rows, cols), dtype=jnp.float32)
    loop = cols if axis == 0 else rows
    for i in range(loop):
        sub = jax.random.fold_in(key, i)
        if axis == 0:
            idx = jax.random.permutation(sub, rows)[:nsel]
            mask = mask.at[idx, i].set(1.0)
        else:
            idx = jax.random.permutation(sub, cols)[:nsel]
            mask = mask.at[i, idx].set(1.0)
    return mask


if __name__ == "__main__":
    # Small shapes consistent with the module (low_rank=True path).
    # B=256 with tile_b=64 gives grid=(4,), so the pipelined / dual-TC path
    # is actually exercised.
    B, n, k = 256, 128, 32

    key = jax.random.PRNGKey(0)
    k_g, k_mu, k_mv, k_u, k_v, k_i, k_s, k_x = jax.random.split(key, 8)

    # Fixed gamma row (1, n), broadcasts over the batch in g * x.
    g = jax.random.uniform(k_g, (1, n), dtype=jnp.float32)

    # Deterministic parameter init (uniform [0,1) like torch.rand, sparse-masked).
    mask_U = make_sparse_mask(k_mu, n, k, 0.2, axis=0)
    mask_V = make_sparse_mask(k_mv, k, n, 0.2, axis=1)
    U = jax.random.uniform(k_u, (n, k), dtype=jnp.float32) * mask_U
    V = jax.random.uniform(k_v, (k, n), dtype=jnp.float32) * mask_V
    I = jax.random.uniform(k_i, (n,), dtype=jnp.float32)

    # Example inputs (s, x).
    s = jax.random.normal(k_s, (B, n), dtype=jnp.float32)
    x = jax.random.normal(k_x, (B, n), dtype=jnp.float32)

    # One-time prep (per parameter update), then the streaming forward kernel.
    params = prepare_landscape_params(U, V, I, g)
    out = optimizer_landscape_forward(s, x, params)
    out = jax.block_until_ready(out)

    # Matched-precision reference (same bf16 operands, f32 accumulation).
    W_f32 = jnp.dot(U, V, preferred_element_type=jnp.float32)
    ref_bf = (jnp.dot(s.astype(jnp.bfloat16), W_f32.astype(jnp.bfloat16),
                      preferred_element_type=jnp.float32)
              + I[None, :] - g * x)
    # Full-f32 reference: loose check (bf16 operand rounding ~1e-2 level).
    ref_f32 = s @ U @ V + I[None, :] - g * x

    assert out.shape == (B, n)
    assert jnp.allclose(out, ref_bf, atol=2e-3, rtol=2e-3), "mismatch vs bf16 ref"
    assert jnp.allclose(out, ref_f32, atol=0.5, rtol=5e-2), "mismatch vs f32 ref"

    print("KERNEL_OK")
</pallas_src>

<mosaic_0001>
module attributes {stable_mosaic.version = 11 : i64} {
  func.func @_landscape_kernel(%arg0: i32, %arg1: memref<64x128xf32, #tpu.memory_space<vmem>>, %arg2: memref<128x128xbf16, #tpu.memory_space<vmem>>, %arg3: memref<1x128xf32, #tpu.memory_space<vmem>>, %arg4: memref<1x128xf32, #tpu.memory_space<vmem>>, %arg5: memref<64x128xf32, #tpu.memory_space<vmem>>, %arg6: memref<64x128xf32, #tpu.memory_space<vmem>>) attributes {dimension_semantics = [#tpu.dimension_semantics<parallel>], iteration_bounds = array<i64: 4>, scalar_prefetch = 0 : i64, scratch_operands = 0 : i64, tpu.core_type = #tpu.core_type<tc>, window_params = [{transform_indices = @transform_0, window_bounds = array<i64: 64, 128>}, {pipeline_mode = #tpu.pipeline_mode<synchronous>, transform_indices = @transform_1, window_bounds = array<i64: 128, 128>}, {pipeline_mode = #tpu.pipeline_mode<synchronous>, transform_indices = @transform_2, window_bounds = array<i64: 1, 128>}, {pipeline_mode = #tpu.pipeline_mode<synchronous>, transform_indices = @transform_3, window_bounds = array<i64: 1, 128>}, {transform_indices = @transform_4, window_bounds = array<i64: 64, 128>}, {transform_indices = @transform_5, window_bounds = array<i64: 64, 128>}]} {
    %c0 = arith.constant 0 : index
    %c0_0 = arith.constant 0 : index
    %0 = vector.load %arg1[%c0, %c0_0] : memref<64x128xf32, #tpu.memory_space<vmem>>, vector<64x128xf32>
    %1 = arith.truncf %0 : vector<64x128xf32> to vector<64x128xbf16>
    %c0_1 = arith.constant 0 : index
    %c0_2 = arith.constant 0 : index
    %2 = vector.load %arg2[%c0_1, %c0_2] : memref<128x128xbf16, #tpu.memory_space<vmem>>, vector<128x128xbf16>
    %cst = arith.constant dense<0.000000e+00> : vector<64x128xf32>
    %3 = tpu.matmul %1, %2, %cst {dimension_numbers = #tpu.dot_dimension_numbers<[1], [0], [0], [1], [0, 0, 1, 1], [], []>} : vector<64x128xbf16>, vector<128x128xbf16>, vector<64x128xf32> -> vector<64x128xf32>
    %c0_3 = arith.constant 0 : index
    %c0_4 = arith.constant 0 : index
    %4 = vector.load %arg3[%c0_3, %c0_4] : memref<1x128xf32, #tpu.memory_space<vmem>>, vector<1x128xf32>
    %5 = vector.broadcast %4 : vector<1x128xf32> to vector<64x128xf32>
    %6 = arith.addf %3, %5 : vector<64x128xf32>
    %c0_5 = arith.constant 0 : index
    %c0_6 = arith.constant 0 : index
    %7 = vector.load %arg4[%c0_5, %c0_6] : memref<1x128xf32, #tpu.memory_space<vmem>>, vector<1x128xf32>
    %c0_7 = arith.constant 0 : index
    %c0_8 = arith.constant 0 : index
    %8 = vector.load %arg5[%c0_7, %c0_8] : memref<64x128xf32, #tpu.memory_space<vmem>>, vector<64x128xf32>
    %9 = vector.broadcast %7 : vector<1x128xf32> to vector<64x128xf32>
    %10 = arith.mulf %9, %8 : vector<64x128xf32>
    %11 = arith.subf %6, %10 : vector<64x128xf32>
    %c0_9 = arith.constant 0 : index
    %c0_10 = arith.constant 0 : index
    %12 = vector.load %arg6[%c0_9, %c0_10] : memref<64x128xf32, #tpu.memory_space<vmem>>, vector<64x128xf32>
    tpu.vector_store %arg6[%c0_9, %c0_10], %11 {strides = array<i32>} : memref<64x128xf32, #tpu.memory_space<vmem>>, vector<64x128xf32>,
    return
  }
  func.func @transform_0(%arg0: i32) -> (i32, i32) {
    %c0_i32 = arith.constant 0 : i32
    %c0_i32_0 = arith.constant 0 : i32
    return %arg0, %c0_i32 : i32, i32
  }
  func.func @transform_1(%arg0: i32) -> (i32, i32) {
    %c0_i32 = arith.constant 0 : i32
    %c0_i32_0 = arith.constant 0 : i32
    %c0_i32_1 = arith.constant 0 : i32
    return %c0_i32, %c0_i32_0 : i32, i32
  }
  func.func @transform_2(%arg0: i32) -> (i32, i32) {
    %c0_i32 = arith.constant 0 : i32
    %c0_i32_0 = arith.constant 0 : i32
    %c0_i32_1 = arith.constant 0 : i32
    return %c0_i32, %c0_i32_0 : i32, i32
  }
  func.func @transform_3(%arg0: i32) -> (i32, i32) {
    %c0_i32 = arith.constant 0 : i32
    %c0_i32_0 = arith.constant 0 : i32
    %c0_i32_1 = arith.constant 0 : i32
    return %c0_i32, %c0_i32_0 : i32, i32
  }
  func.func @transform_4(%arg0: i32) -> (i32, i32) {
    %c0_i32 = arith.constant 0 : i32
    %c0_i32_0 = arith.constant 0 : i32
    return %arg0, %c0_i32 : i32, i32
  }
  func.func @transform_5(%arg0: i32) -> (i32, i32) {
    %c0_i32 = arith.constant 0 : i32
    %c0_i32_0 = arith.constant 0 : i32
    return %arg0, %c0_i32 : i32, i32
  }
}

module attributes {stable_mosaic.version = 11 : i64} {
  func.func @_landscape_kernel(%arg0: i32, %arg1: memref<64x128xf32, #tpu.memory_space<vmem>>, %arg2: memref<128x128xbf16, #tpu.memory_space<vmem>>, %arg3: memref<1x128xf32, #tpu.memory_space<vmem>>, %arg4: memref<1x128xf32, #tpu.memory_space<vmem>>, %arg5: memref<64x128xf32, #tpu.memory_space<vmem>>, %arg6: memref<64x128xf32, #tpu.memory_space<vmem>>) attributes {dimension_semantics = [#tpu.dimension_semantics<parallel>], iteration_bounds = array<i64: 4>, scalar_prefetch = 0 : i64, scratch_operands = 0 : i64, tpu.core_type = #tpu.core_type<tc>, window_params = [{transform_indices = @transform_0, window_bounds = array<i64: 64, 128>}, {pipeline_mode = #tpu.pipeline_mode<synchronous>, transform_indices = @transform_1, window_bounds = array<i64: 128, 128>}, {pipeline_mode = #tpu.pipeline_mode<synchronous>, transform_indices = @transform_2, window_bounds = array<i64: 1, 128>}, {pipeline_mode = #tpu.pipeline_mode<synchronous>, transform_indices = @transform_3, window_bounds = array<i64: 1, 128>}, {transform_indices = @transform_4, window_bounds = array<i64: 64, 128>}, {transform_indices = @transform_5, window_bounds = array<i64: 64, 128>}]} {
    %c0 = arith.constant 0 : index
    %c0_0 = arith.constant 0 : index
    %0 = vector.load %arg1[%c0, %c0_0] : memref<64x128xf32, #tpu.memory_space<vmem>>, vector<64x128xf32>
    %1 = arith.truncf %0 : vector<64x128xf32> to vector<64x128xbf16>
    %c0_1 = arith.constant 0 : index
    %c0_2 = arith.constant 0 : index
    %2 = vector.load %arg2[%c0_1, %c0_2] : memref<128x128xbf16, #tpu.memory_space<vmem>>, vector<128x128xbf16>
    %cst = arith.constant dense<0.000000e+00> : vector<64x128xf32>
    %3 = tpu.matmul %1, %2, %cst {dimension_numbers = #tpu.dot_dimension_numbers<[1], [0], [0], [1], [0, 0, 1, 1], [], []>} : vector<64x128xbf16>, vector<128x128xbf16>, vector<64x128xf32> -> vector<64x128xf32>
    %c0_3 = arith.constant 0 : index
    %c0_4 = arith.constant 0 : index
    %4 = vector.load %arg3[%c0_3, %c0_4] : memref<1x128xf32, #tpu.memory_space<vmem>>, vector<1x128xf32>
    %5 = vector.broadcast %4 : vector<1x128xf32> to vector<64x128xf32>
    %6 = arith.addf %3, %5 : vector<64x128xf32>
    %c0_5 = arith.constant 0 : index
    %c0_6 = arith.constant 0 : index
    %7 = vector.load %arg4[%c0_5, %c0_6] : memref<1x128xf32, #tpu.memory_space<vmem>>, vector<1x128xf32>
    %c0_7 = arith.constant 0 : index
    %c0_8 = arith.constant 0 : index
    %8 = vector.load %arg5[%c0_7, %c0_8] : memref<64x128xf32, #tpu.memory_space<vmem>>, vector<64x128xf32>
    %9 = vector.broadcast %7 : vector<1x128xf32> to vector<64x128xf32>
    %10 = arith.mulf %9, %8 : vector<64x128xf32>
    %11 = arith.subf %6, %10 : vector<64x128xf32>
    %c0_9 = arith.constant 0 : index
    %c0_10 = arith.constant 0 : index
    %12 = vector.load %arg6[%c0_9, %c0_10] : memref<64x128xf32, #tpu.memory_space<vmem>>, vector<64x128xf32>
    tpu.vector_store %arg6[%c0_9, %c0_10], %11 {strides = array<i32>} : memref<64x128xf32, #tpu.memory_space<vmem>>, vector<64x128xf32>,
    return
  }
  func.func @transform_0(%arg0: i32) -> (i32, i32) {
    %c0_i32 = arith.constant 0 : i32
    %c0_i32_0 = arith.constant 0 : i32
    return %arg0, %c0_i32 : i32, i32
  }
  func.func @transform_1(%arg0: i32) -> (i32, i32) {
    %c0_i32 = arith.constant 0 : i32
    %c0_i32_0 = arith.constant 0 : i32
    %c0_i32_1 = arith.constant 0 : i32
    return %c0_i32, %c0_i32_0 : i32, i32
  }
  func.func @transform_2(%arg0: i32) -> (i32, i32) {
    %c0_i32 = arith.constant 0 : i32
    %c0_i32_0 = arith.constant 0 : i32
    %c0_i32_1 = arith.constant 0 : i32
    return %c0_i32, %c0_i32_0 : i32, i32
  }
  func.func @transform_3(%arg0: i32) -> (i32, i32) {
    %c0_i32 = arith.constant 0 : i32
    %c0_i32_0 = arith.constant 0 : i32
    %c0_i32_1 = arith.constant 0 : i32
    return %c0_i32, %c0_i32_0 : i32, i32
  }
  func.func @transform_4(%arg0: i32) -> (i32, i32) {
    %c0_i32 = arith.constant 0 : i32
    %c0_i32_0 = arith.constant 0 : i32
    return %arg0, %c0_i32 : i32, i32
  }
  func.func @transform_5(%arg0: i32) -> (i32, i32) {
    %c0_i32 = arith.constant 0 : i32
    %c0_i32_0 = arith.constant 0 : i32
    return %arg0, %c0_i32 : i32, i32
  }
}

</mosaic_0001>

<llo_original>
// kernel: _forward_impl.1
$region0: #{_forward_impl.1}
  #allocation0 [shape = 'u32[]', space=smem, size = 0x4, offset = 0x4, fixed_abs, tag = 'smem constant byte address 0x4 - core index']
  #allocation1 [shape = 'u32[144,128]{1,0:T(1,128)}', space=vmem, size = 0x12000, scoped, tag = 'internal scratch']
  %s0 = inlined_call_operand.hbm [shape: f32[256,128], index: 0, kind: input, shape index: {}]
  %s1 = inlined_call_operand.hbm [shape: bf16[128,128], index: 1, kind: input, shape index: {}]
  %s2 = inlined_call_operand.vmem [shape: f32[1,128], index: 2, kind: input, shape index: {}]
  %s3 = inlined_call_operand.vmem [shape: f32[1,128], index: 3, kind: input, shape index: {}]
  %s4 = inlined_call_operand.hbm [shape: f32[256,128], index: 4, kind: input, shape index: {}]
  %s5 = inlined_call_operand.hbm [shape: f32[256,128], index: 5, kind: output, shape index: {}]
  %s6 = sld [smem:[#allocation0]]
  $region65: #{_forward_impl.1} parent=0
    _
  %s8 = ssub.s32 1, %s6
  %s9 = scalar_select 0, %s8, %s6
  $region1: #{_forward_impl.1} parent=0
    #allocation2 [shape = 'u8[65536]{0}', space=vmem, size = 0x10000, scoped, tag = 'input window, operand 0']
    #allocation3 [shape = 's32[2]{0}', space=sflag, size = 0x8, scoped, tag = 'scoped memory for _forward_impl.1']
    #allocation4 [shape = 's32[2]{0}', space=sflag, size = 0x8, scoped, tag = 'scoped memory for _forward_impl.1']
    #allocation5 [shape = 'u8[32768]{0}', space=vmem, size = 0x8000, scoped, tag = 'input window, operand 1, single buffered']
    #allocation6 [shape = 's32[1]{0}', space=sflag, size = 0x4, scoped, tag = 'scoped memory for _forward_impl.1']
    #allocation7 [shape = 'u8[65536]{0}', space=vmem, size = 0x10000, scoped, tag = 'input window, operand 4']
    #allocation8 [shape = 'u8[65536]{0}', space=vmem, size = 0x10000, scoped, tag = 'output window, operand 0']
    %10 = vsyncpa [#allocation3], 0
    %s11 = scalar_lea.sflag [#allocation3], 1
    %12 = vsyncpa %s11, 0
    %13 = vsyncpa [#allocation6], 0
    %14 = vsyncpa [#allocation4], 0
    %s15 = scalar_lea.sflag [#allocation4], 1
    %16 = vsyncpa %s15, 0
    loop: start=0, step=1, limit=6
    $region2: #{_forward_impl.1} parent=1 // loop_pre_header
      _
    $region3: #{_forward_impl.1} parent=1 // loop_header
      %s18 = sphi 0, %s22
      %p19 = scmp.ge.s32.totalorder %s18, 6
      %s28 = sphi 0, %s30
      %s31 = sphi 0, %s28
      %s32 = sphi 0, %s31
      %s48 = sphi 0, %s32
      %s52 = sphi 0, %s52
      %s54 = sphi 0, %s52
      %s55 = sphi 0, %s54
      %s69 = sphi 0, %s55
      %s73 = sphi 0, %s73
      %s75 = sphi 0, %s73
      %s76 = sphi 0, %s75
      %s90 = sphi 0, %s76
      %s94 = sphi 0, %s94
      %s96 = sphi 0, %s94
      %s97 = sphi 0, %s96
      %s111 = sphi 0, %s97
      %s117 = sphi 0, %s119
      %s120 = sphi 0, %s117
      %s121 = sphi 0, %s120
      %s137 = sphi 0, %s121
      %s143 = sphi 0, %s145
      %s146 = sphi 0, %s143
      %s147 = sphi 0, %s146
      %s163 = sphi 0, %s147
    $region4: #{_forward_impl.1} parent=1 // loop_header_branch
      %21 = sbr.rel (%p19) target = $region8
    $region5: #{_forward_impl.1} parent=1 // loop_body
      %s23 = ssub.s32 %s18, 1
      %s24 = ssub.s32 %s18, 2
      %s25 = sadd.s32 %s18, 1
      %s26 = ssub.s32 %s18, %s25
      %p27 = scmp.eq.s32.totalorder %s26, 0
      %s29 = sadd.s32 %s28, 1
      %s30 = scalar_select %p27, %s28, %s29
      %p33 = pneg %p27
      %p34 = scmp.eq.s32.totalorder %s18, 3
      %p35 = por %p33, %p34
      %p36 = scmp.ne.s32.totalorder %s28, %s31
      %p37 = scmp.eq.s32.totalorder %s18, 0
      %p38 = por %p36, %p37
      %p39 = scmp.ne.s32.totalorder %s28, %s31
      %p40 = scmp.eq.s32.totalorder %s23, 3
      %p41 = por %p39, %p40
      %p42 = scmp.ne.s32.totalorder %s31, %s32
      %p43 = scmp.eq.s32.totalorder %s23, 0
      %p44 = por %p42, %p43
      %p45 = scmp.ne.s32.totalorder %s31, %s32
      %p46 = scmp.eq.s32.totalorder %s24, 3
      %p47 = por %p45, %p46
      %p49 = scmp.ne.s32.totalorder %s32, %s48
      %p50 = scmp.eq.s32.totalorder %s24, 0
      %p51 = por %p49, %p50
      %s53 = sadd.s32 %s52, 1
      %p56 = scmp.eq.s32.totalorder %s18, 3
      %p57 = scmp.ne.s32.totalorder %s52, %s54
      %p58 = scmp.eq.s32.totalorder %s18, 0
      %p59 = por %p57, %p58
      %p60 = scmp.ne.s32.totalorder %s52, %s54
      %p61 = scmp.eq.s32.totalorder %s23, 3
      %p62 = por %p60, %p61
      %p63 = scmp.ne.s32.totalorder %s54, %s55
      %p64 = scmp.eq.s32.totalorder %s23, 0
      %p65 = por %p63, %p64
      %p66 = scmp.ne.s32.totalorder %s54, %s55
      %p67 = scmp.eq.s32.totalorder %s24, 3
      %p68 = por %p66, %p67
      %p70 = scmp.ne.s32.totalorder %s55, %s69
      %p71 = scmp.eq.s32.totalorder %s24, 0
      %p72 = por %p70, %p71
      %s74 = sadd.s32 %s73, 1
      %p77 = scmp.eq.s32.totalorder %s18, 3
      %p78 = scmp.ne.s32.totalorder %s73, %s75
      %p79 = scmp.eq.s32.totalorder %s18, 0
      %p80 = por %p78, %p79
      %p81 = scmp.ne.s32.totalorder %s73, %s75
      %p82 = scmp.eq.s32.totalorder %s23, 3
      %p83 = por %p81, %p82
      %p84 = scmp.ne.s32.totalorder %s75, %s76
      %p85 = scmp.eq.s32.totalorder %s23, 0
      %p86 = por %p84, %p85
      %p87 = scmp.ne.s32.totalorder %s75, %s76
      %p88 = scmp.eq.s32.totalorder %s24, 3
      %p89 = por %p87, %p88
      %p91 = scmp.ne.s32.totalorder %s76, %s90
      %p92 = scmp.eq.s32.totalorder %s24, 0
      %p93 = por %p91, %p92
      %s95 = sadd.s32 %s94, 1
      %p98 = scmp.eq.s32.totalorder %s18, 3
      %p99 = scmp.ne.s32.totalorder %s94, %s96
      %p100 = scmp.eq.s32.totalorder %s18, 0
      %p101 = por %p99, %p100
      %p102 = scmp.ne.s32.totalorder %s94, %s96
      %p103 = scmp.eq.s32.totalorder %s23, 3
      %p104 = por %p102, %p103
      %p105 = scmp.ne.s32.totalorder %s96, %s97
      %p106 = scmp.eq.s32.totalorder %s23, 0
      %p107 = por %p105, %p106
      %p108 = scmp.ne.s32.totalorder %s96, %s97
      %p109 = scmp.eq.s32.totalorder %s24, 3
      %p110 = por %p108, %p109
      %p112 = scmp.ne.s32.totalorder %s97, %s111
      %p113 = scmp.eq.s32.totalorder %s24, 0
      %p114 = por %p112, %p113
      %s115 = ssub.s32 %s18, %s25
      %p116 = scmp.eq.s32.totalorder %s115, 0
      %s118 = sadd.s32 %s117, 1
      %s119 = scalar_select %p116, %s117, %s118
      %p122 = pneg %p116
      %p123 = scmp.eq.s32.totalorder %s18, 3
      %p124 = por %p122, %p123
      %p125 = scmp.ne.s32.totalorder %s117, %s120
      %p126 = scmp.eq.s32.totalorder %s18, 0
      %p127 = por %p125, %p126
      %p128 = scmp.ne.s32.totalorder %s117, %s120
      %p129 = scmp.eq.s32.totalorder %s23, 3
      %p130 = por %p128, %p129
      %p131 = scmp.ne.s32.totalorder %s120, %s121
      %p132 = scmp.eq.s32.totalorder %s23, 0
      %p133 = por %p131, %p132
      %p134 = scmp.ne.s32.totalorder %s120, %s121
      %p135 = scmp.eq.s32.totalorder %s24, 3
      %p136 = por %p134, %p135
      %p138 = scmp.ne.s32.totalorder %s121, %s137
      %p139 = scmp.eq.s32.totalorder %s24, 0
      %p140 = por %p138, %p139
      %s141 = ssub.s32 %s18, %s25
      %p142 = scmp.eq.s32.totalorder %s141, 0
      %s144 = sadd.s32 %s143, 1
      %s145 = scalar_select %p142, %s143, %s144
      %p148 = pneg %p142
      %p149 = scmp.eq.s32.totalorder %s18, 3
      %p150 = por %p148, %p149
      %p151 = scmp.ne.s32.totalorder %s143, %s146
      %p152 = scmp.eq.s32.totalorder %s18, 0
      %p153 = por %p151, %p152
      %p154 = scmp.ne.s32.totalorder %s143, %s146
      %p155 = scmp.eq.s32.totalorder %s23, 3
      %p156 = por %p154, %p155
      %p157 = scmp.ne.s32.totalorder %s146, %s147
      %p158 = scmp.eq.s32.totalorder %s23, 0
      %p159 = por %p157, %p158
      %p160 = scmp.ne.s32.totalorder %s146, %s147
      %p161 = scmp.eq.s32.totalorder %s24, 3
      %p162 = por %p160, %p161
      %p164 = scmp.ne.s32.totalorder %s147, %s163
      %p165 = scmp.eq.s32.totalorder %s24, 0
      %p166 = por %p164, %p165
      %p167 = scmp.le.s32.totalorder 1, %s18
      %p168 = scmp.lt.s32.totalorder %s18, 5
      %p169 = pnand %p167, %p168
      %p170 = pneg %p169
      // Predicated region
      $region9: #{_forward_impl.1} parent=5 // pred_check
        _
      $region10: #{_forward_impl.1} parent=5 // pred_check_branch
        %172 = sbr.rel (%p169) target = $region12
      $region11: #{_forward_impl.1} parent=5 // pred_region
        %s173 = ssub.s32 %s18, 1
        // Predicated region
        $region13: #{_forward_impl.1} parent=11 // pred_check
          %p174 = pneg %p65
        $region14: #{_forward_impl.1} parent=11 // pred_check_branch
          %176 = sbr.rel (%p174) target = $region16
        $region15: #{_forward_impl.1} parent=11 // pred_region
          %s178 = ssub.s32 1024, 1024
          %179 = vsyncadd [#allocation6], %s178
          %s180 = sshll.u32 [#allocation5], 4
          %s181 = int_to_ptr.vmem [resolvable:$true] %s180
          %186 = dma.hbm_to_vmem [thread:$0]  %s1, 1024, %s181, [#allocation6], 64, 64, 4
        $region16: #{_forward_impl.1} parent=11 // pred_fallthru
          _
        // Predicated region
        $region17: #{_forward_impl.1} parent=11 // pred_check
          %p187 = pneg %p86
        $region18: #{_forward_impl.1} parent=11 // pred_check_branch
          %189 = sbr.rel (%p187) target = $region20
        $region19: #{_forward_impl.1} parent=11 // pred_region
          _
        $region20: #{_forward_impl.1} parent=11 // pred_fallthru
          _
        // Predicated region
        $region21: #{_forward_impl.1} parent=11 // pred_check
          %p190 = pneg %p107
        $region22: #{_forward_impl.1} parent=11 // pred_check_branch
          %192 = sbr.rel (%p190) target = $region24
        $region23: #{_forward_impl.1} parent=11 // pred_region
          _
        $region24: #{_forward_impl.1} parent=11 // pred_fallthru
          _
      $region12: #{_forward_impl.1} parent=5 // pred_fallthru
        _
      %p193 = scmp.lt.s32.totalorder %s18, 4
      // Predicated region
      $region25: #{_forward_impl.1} parent=5 // pred_check
        %p194 = pneg %p193
      $region26: #{_forward_impl.1} parent=5 // pred_check_branch
        %196 = sbr.rel (%p194) target = $region28
      $region27: #{_forward_impl.1} parent=5 // pred_region
        // Predicated region
        $region29: #{_forward_impl.1} parent=27 // pred_check
          %p197 = pneg %p38
        $region30: #{_forward_impl.1} parent=27 // pred_check_branch
          %199 = sbr.rel (%p197) target = $region32
        $region31: #{_forward_impl.1} parent=27 // pred_region
          %s200 = sand.u32 %s18, 1
          %s201 = scalar_lea.sflag [#allocation3], %s200
          %s202 = sand.u32 %s28, 1
          %s203 = smul.addr %s202, 64
          %s204 = scalar_lea.vmem [#allocation2], %s203
          %s205 = smul.u32 8, %s18
          %s207 = ssub.s32 1024, 1024
          %208 = vsyncadd %s201, %s207
          %s209 = smul.addr %s205, 128
          %s210 = scalar_lea.hbm %s0, %s209
          %s211 = sshll.u32 %s204, 4
          %s212 = int_to_ptr.vmem [resolvable:$true] %s211
          %217 = dma.hbm_to_vmem [thread:$0]  %s210, 1024, %s212, %s201, 128, 128, 8
        $region32: #{_forward_impl.1} parent=27 // pred_fallthru
          _
        // Predicated region
        $region33: #{_forward_impl.1} parent=27 // pred_check
          %p218 = pneg %p127
        $region34: #{_forward_impl.1} parent=27 // pred_check_branch
          %220 = sbr.rel (%p218) target = $region36
        $region35: #{_forward_impl.1} parent=27 // pred_region
          %s221 = sand.u32 %s18, 1
          %s222 = scalar_lea.sflag [#allocation3], %s221
          %s223 = sand.u32 %s117, 1
          %s224 = smul.addr %s223, 64
          %s225 = scalar_lea.vmem [#allocation7], %s224
          %s226 = smul.u32 8, %s18
          %s228 = ssub.s32 1024, 1024
          %229 = vsyncadd %s222, %s228
          %s230 = smul.addr %s226, 128
          %s231 = scalar_lea.hbm %s4, %s230
          %s232 = sshll.u32 %s225, 4
          %s233 = int_to_ptr.vmem [resolvable:$true] %s232
          %238 = dma.hbm_to_vmem [thread:$0]  %s231, 1024, %s233, %s222, 128, 128, 8
        $region36: #{_forward_impl.1} parent=27 // pred_fallthru
          _
      $region28: #{_forward_impl.1} parent=5 // pred_fallthru
        _
      %p239 = scmp.le.s32.totalorder 1, %s18
      %p240 = scmp.lt.s32.totalorder %s18, 5
      %p241 = pnand %p239, %p240
      %p242 = pneg %p241
      // Predicated region
      $region37: #{_forward_impl.1} parent=5 // pred_check
        _
      $region38: #{_forward_impl.1} parent=5 // pred_check_branch
        %244 = sbr.rel (%p241) target = $region40
      $region39: #{_forward_impl.1} parent=5 // pred_region
        %s245 = ssub.s32 %s18, 1
        %s246 = sand.u32 %s23, 1
        %s247 = scalar_lea.sflag [#allocation3], %s246
        %s248 = sand.u32 %s31, 1
        %s249 = smul.addr %s248, 64
        %s250 = scalar_lea.vmem [#allocation2], %s249
        // Predicated region
        $region41: #{_forward_impl.1} parent=39 // pred_check
          %p251 = pneg %p44
        $region42: #{_forward_impl.1} parent=39 // pred_check_branch
          %253 = sbr.rel (%p251) target = $region44
        $region43: #{_forward_impl.1} parent=39 // pred_region
          %254 = dma.done %s247, 1024
        $region44: #{_forward_impl.1} parent=39 // pred_fallthru
          _
        // Predicated region
        $region45: #{_forward_impl.1} parent=39 // pred_check
          %p255 = pneg %p65
        $region46: #{_forward_impl.1} parent=39 // pred_check_branch
          %257 = sbr.rel (%p255) target = $region48
        $region47: #{_forward_impl.1} parent=39 // pred_region
          %258 = dma.done [#allocation6], 1024
        $region48: #{_forward_impl.1} parent=39 // pred_fallthru
          _
        %s259 = sand.u32 %s23, 1
        %s260 = scalar_lea.sflag [#allocation3], %s259
        %s261 = sand.u32 %s120, 1
        %s262 = smul.addr %s261, 64
        %s263 = scalar_lea.vmem [#allocation7], %s262
        // Predicated region
        $region49: #{_forward_impl.1} parent=39 // pred_check
          %p264 = pneg %p133
        $region50: #{_forward_impl.1} parent=39 // pred_check_branch
          %266 = sbr.rel (%p264) target = $region52
        $region51: #{_forward_impl.1} parent=39 // pred_region
          %267 = dma.done %s260, 1024
        $region52: #{_forward_impl.1} parent=39 // pred_fallthru
          _
        %s268 = sand.u32 %s23, 1
        %s269 = scalar_lea.sflag [#allocation3], %s268
        %s270 = sand.u32 %s31, 1
        %s271 = smul.addr %s270, 64
        %s272 = scalar_lea.vmem [#allocation2], %s271
        %p273 = pneg %p44
        %p274 = pneg %p41
        %p275 = pneg %p65
        %p276 = pneg %p62
        %p277 = pneg %p86
        %p278 = pneg %p83
        %p279 = pneg %p107
        %p280 = pneg %p104
        %s281 = sand.u32 %s23, 1
        %s282 = scalar_lea.sflag [#allocation3], %s281
        %s283 = sand.u32 %s120, 1
        %s284 = smul.addr %s283, 64
        %s285 = scalar_lea.vmem [#allocation7], %s284
        %p286 = pneg %p133
        %p287 = pneg %p130
        %p288 = pneg %p159
        %p289 = pneg %p156
        %s290 = sand.u32 %s146, 1
        %s291 = scalar_lea.sflag [#allocation4], %s290
        %s292 = sand.u32 %s146, 1
        %s293 = smul.addr %s292, 64
        %s294 = scalar_lea.vmem [#allocation8], %s293
        %s295 = smul.u32 8, %s23
        %s296 = smul.u32 8, %s23
        %s297 = smul.u32 8, %s23
        %v299 = vld [vmem:[%s250] sm:$0xff]
        %v300 = vld [vmem:[%s250 + $0x8] sm:$0xff]
        %v301 = vld [vmem:[%s250 + $0x10] sm:$0xff]
        %v302 = vld [vmem:[%s250 + $0x18] sm:$0xff]
        %v303 = vld [vmem:[%s250 + $0x20] sm:$0xff]
        %v304 = vld [vmem:[%s250 + $0x28] sm:$0xff]
        %v305 = vld [vmem:[%s250 + $0x30] sm:$0xff]
        %v306 = vld [vmem:[%s250 + $0x38] sm:$0xff]
        %v307 = vpack.c.bf16 %v300, %v299
        %v308 = vpack.c.bf16 %v302, %v301
        %v309 = vpack.c.bf16 %v304, %v303
        %v310 = vpack.c.bf16 %v306, %v305
        %v311 = vld [vmem:[#allocation5] sm:$0xf]
        %v312 = vld [vmem:[#allocation5 + $0x4] sm:$0xf]
        %v313 = vld [vmem:[#allocation5 + $0x8] sm:$0xf]
        %v314 = vld [vmem:[#allocation5 + $0xc] sm:$0xf]
        %v315 = vld [vmem:[#allocation5 + $0x10] sm:$0xf]
        %v316 = vld [vmem:[#allocation5 + $0x14] sm:$0xf]
        %v317 = vld [vmem:[#allocation5 + $0x18] sm:$0xf]
        %v318 = vld [vmem:[#allocation5 + $0x1c] sm:$0xf]
        %v319 = vld [vmem:[#allocation5 + $0x20] sm:$0xf]
        %v320 = vld [vmem:[#allocation5 + $0x24] sm:$0xf]
        %v321 = vld [vmem:[#allocation5 + $0x28] sm:$0xf]
        %v322 = vld [vmem:[#allocation5 + $0x2c] sm:$0xf]
        %v323 = vld [vmem:[#allocation5 + $0x30] sm:$0xf]
        %v324 = vld [vmem:[#allocation5 + $0x34] sm:$0xf]
        %v325 = vld [vmem:[#allocation5 + $0x38] sm:$0xf]
        %v326 = vld [vmem:[#allocation5 + $0x3c] sm:$0xf]
        %v327 = vld [vmem:[%s2] sm:$0x1]
        %v329 = vlaneseq
        %v330 = vshrl.u32 %v329, 7
        %v331 = vsub.s32 0, %v330
        %v332 = vrot.slane %v327, %v331
        %v350 = vunpack.c.l.b16 %v311
        %v351 = vunpack.c.l.b16 %v312
        %v352 = vunpack.c.l.b16 %v313
        %v353 = vunpack.c.l.b16 %v314
        %v354 = vunpack.c.l.b16 %v315
        %v355 = vunpack.c.l.b16 %v316
        %v356 = vunpack.c.l.b16 %v317
        %v357 = vunpack.c.l.b16 %v318
        %v358 = vunpack.c.l.b16 %v319
        %v359 = vunpack.c.l.b16 %v320
        %v360 = vunpack.c.l.b16 %v321
        %v361 = vunpack.c.l.b16 %v322
        %v362 = vunpack.c.l.b16 %v323
        %v363 = vunpack.c.l.b16 %v324
        %v364 = vunpack.c.l.b16 %v325
        %v365 = vunpack.c.l.b16 %v326
        %v366 = vpack.c.b16 %v351, %v350
        %v367 = vpack.c.b16 %v353, %v352
        %v368 = vpack.c.b16 %v355, %v354
        %v369 = vpack.c.b16 %v357, %v356
        %v370 = vpack.c.b16 %v359, %v358
        %v371 = vpack.c.b16 %v361, %v360
        %v372 = vpack.c.b16 %v363, %v362
        %v373 = vpack.c.b16 %v365, %v364
        %382 = vmatprep.subr.bf16.mxu0 0
        %383 = vmatpush1.bf16.msra.mxu0 %v366
        %384 = vmatprep.subr.bf16.mxu0 0
        %385 = vmatpush1.bf16.msra.mxu0 %v367
        %386 = vmatprep.subr.bf16.mxu0 0
        %387 = vmatpush1.bf16.msra.mxu0 %v368
        %388 = vmatprep.subr.bf16.mxu0 0
        %389 = vmatpush1.bf16.msra.mxu0 %v369
        %390 = vmatprep.subr.bf16.mxu0 0
        %391 = vmatpush1.bf16.msra.mxu0 %v370
        %392 = vmatprep.subr.bf16.mxu0 0
        %393 = vmatpush1.bf16.msra.mxu0 %v371
        %394 = vmatprep.subr.bf16.mxu0 0
        %395 = vmatpush1.bf16.msra.mxu0 %v372
        %396 = vmatprep.subr.bf16.mxu0 0
        %397 = vmatpush1.bf16.msra.mxu0 %v373
        %398 = vmatprep.subr.bf16.mxu0 0
        %399 = vmatpush1.bf16.msra.mxu0 0
        %400 = vmatprep.subr.bf16.mxu0 0
        %401 = vmatpush1.bf16.msra.mxu0 0
        %402 = vmatprep.subr.bf16.mxu0 0
        %403 = vmatpush1.bf16.msra.mxu0 0
        %404 = vmatprep.subr.bf16.mxu0 0
        %405 = vmatpush1.bf16.msra.mxu0 0
        %406 = vmatprep.subr.bf16.mxu0 0
        %407 = vmatpush1.bf16.msra.mxu0 0
        %408 = vmatprep.subr.bf16.mxu0 0
        %409 = vmatpush1.bf16.msra.mxu0 0
        %410 = vmatprep.subr.bf16.mxu0 0
        %411 = vmatpush1.bf16.msra.mxu0 0
        %412 = vmatprep.subr.bf16.mxu0 0
        %413 = vmatpush1.bf16.msra.mxu0 0
        %414 = vmatprep.mubr.bf16.mxu0 0
        %415 = vmatmul.mubr.bf16.gmra.mrb[0].mxu0 %v307
        %v416 = vpop.f32.mrb[0].mxu0
        %v417 = vadd.f32 %v332, %v416
        %v418 = vpop.f32.mrb[0].mxu0
        %v419 = vpop.f32.mrb[0].mxu0
        %v420 = vadd.f32 %v332, %v419
        %v421 = vpop.f32.mrb[0].mxu0
        %422 = vmatprep.mubr.bf16.mxu0 0
        %423 = vmatmul.mubr.bf16.gmra.mrb[0].mxu0 %v308
        %v424 = vpop.f32.mrb[0].mxu0
        %v425 = vadd.f32 %v332, %v424
        %v426 = vpop.f32.mrb[0].mxu0
        %v427 = vpop.f32.mrb[0].mxu0
        %v428 = vadd.f32 %v332, %v427
        %v429 = vpop.f32.mrb[0].mxu0
        %430 = vmatprep.mubr.bf16.mxu0 0
        %431 = vmatmul.mubr.bf16.gmra.mrb[0].mxu0 %v309
        %v432 = vpop.f32.mrb[0].mxu0
        %v433 = vadd.f32 %v332, %v432
        %v434 = vpop.f32.mrb[0].mxu0
        %v435 = vpop.f32.mrb[0].mxu0
        %v436 = vadd.f32 %v332, %v435
        %v437 = vpop.f32.mrb[0].mxu0
        %438 = vmatprep.mubr.bf16.mxu0 0
        %439 = vmatmul.mubr.bf16.gmra.mrb[0].mxu0 %v310
        %v440 = vpop.f32.mrb[0].mxu0
        %v441 = vadd.f32 %v332, %v440
        %v442 = vpop.f32.mrb[0].mxu0
        %v443 = vpop.f32.mrb[0].mxu0
        %v444 = vadd.f32 %v332, %v443
        %v445 = vpop.f32.mrb[0].mxu0
        %446 = vdwg.mxu0
        %v447 = vld [vmem:[%s3] sm:$0x1]
        %v448 = vld [vmem:[%s263] sm:$0xff]
        %v449 = vld [vmem:[%s263 + $0x8] sm:$0xff]
        %v450 = vld [vmem:[%s263 + $0x10] sm:$0xff]
        %v451 = vld [vmem:[%s263 + $0x18] sm:$0xff]
        %v452 = vld [vmem:[%s263 + $0x20] sm:$0xff]
        %v453 = vld [vmem:[%s263 + $0x28] sm:$0xff]
        %v454 = vld [vmem:[%s263 + $0x30] sm:$0xff]
        %v455 = vld [vmem:[%s263 + $0x38] sm:$0xff]
        %v457 = vlaneseq
        %v458 = vshrl.u32 %v457, 7
        %v459 = vsub.s32 0, %v458
        %v460 = vrot.slane %v447, %v459
        %v462 = vmul.f32 %v460, %v448
        %v463 = vmul.f32 %v460, %v449
        %v464 = vmul.f32 %v460, %v450
        %v465 = vmul.f32 %v460, %v451
        %v466 = vmul.f32 %v460, %v452
        %v467 = vmul.f32 %v460, %v453
        %v468 = vmul.f32 %v460, %v454
        %v469 = vmul.f32 %v460, %v455
        %v470 = vsub.f32 %v417, %v462
        %v471 = vsub.f32 %v420, %v463
        %v472 = vsub.f32 %v425, %v464
        %v473 = vsub.f32 %v428, %v465
        %v474 = vsub.f32 %v433, %v466
        %v475 = vsub.f32 %v436, %v467
        %v476 = vsub.f32 %v441, %v468
        %v477 = vsub.f32 %v444, %v469
        %478 = vst [vmem:[%s294] sm:$0xff] %v470
        %479 = vst [vmem:[%s294 + $0x8] sm:$0xff] %v471
        %480 = vst [vmem:[%s294 + $0x10] sm:$0xff] %v472
        %481 = vst [vmem:[%s294 + $0x18] sm:$0xff] %v473
        %482 = vst [vmem:[%s294 + $0x20] sm:$0xff] %v474
        %483 = vst [vmem:[%s294 + $0x28] sm:$0xff] %v475
        %484 = vst [vmem:[%s294 + $0x30] sm:$0xff] %v476
        %485 = vst [vmem:[%s294 + $0x38] sm:$0xff] %v477
        %s486 = sand.u32 %s146, 1
        %s487 = scalar_lea.sflag [#allocation4], %s486
        %s488 = sand.u32 %s146, 1
        %s489 = smul.addr %s488, 64
        %s490 = scalar_lea.vmem [#allocation8], %s489
        // Predicated region
        $region53: #{_forward_impl.1} parent=39 // pred_check
          %p491 = pneg %p156
        $region54: #{_forward_impl.1} parent=39 // pred_check_branch
          %493 = sbr.rel (%p491) target = $region56
        $region55: #{_forward_impl.1} parent=39 // pred_region
          %s494 = smul.u32 8, %s23
          %s496 = ssub.s32 1024, 1024
          %497 = vsyncadd %s487, %s496
          %s498 = smul.addr %s494, 128
          %s499 = scalar_lea.hbm %s5, %s498
          %s500 = sshll.u32 %s490, 4
          %s501 = int_to_ptr.vmem [resolvable:$true] %s500
          %506 = dma.vmem_to_hbm [thread:$0]  %s501, 1024, %s499, %s487, 128, 128, 8
        $region56: #{_forward_impl.1} parent=39 // pred_fallthru
          _
      $region40: #{_forward_impl.1} parent=5 // pred_fallthru
        _
      %p507 = scmp.le.s32.totalorder 2, %s18
      // Predicated region
      $region57: #{_forward_impl.1} parent=5 // pred_check
        %p508 = pneg %p507
      $region58: #{_forward_impl.1} parent=5 // pred_check_branch
        %510 = sbr.rel (%p508) target = $region60
      $region59: #{_forward_impl.1} parent=5 // pred_region
        %s511 = ssub.s32 %s18, 2
        // Predicated region
        $region61: #{_forward_impl.1} parent=59 // pred_check
          %p512 = pneg %p162
        $region62: #{_forward_impl.1} parent=59 // pred_check_branch
          %514 = sbr.rel (%p512) target = $region64
        $region63: #{_forward_impl.1} parent=59 // pred_region
          %s515 = sand.u32 %s147, 1
          %s516 = scalar_lea.sflag [#allocation4], %s515
          %s517 = sand.u32 %s147, 1
          %s518 = smul.addr %s517, 64
          %s519 = scalar_lea.vmem [#allocation8], %s518
          %520 = dma.done %s516, 1024
        $region64: #{_forward_impl.1} parent=59 // pred_fallthru
          _
      $region60: #{_forward_impl.1} parent=5 // pred_fallthru
        _
    $region6: #{_forward_impl.1} parent=1 // loop_footer
      %s22 = sadd.s32 1, %s18
    $region7: #{_forward_impl.1} parent=1 // loop_footer_branch
      %17 = sbr.rel target = $region3
    $region8: #{_forward_impl.1} parent=1 // loop_exit
      _
    %521 = vsyncpa [#allocation3], 1
    %s522 = scalar_lea.sflag [#allocation3], 1
    %523 = vsyncpa %s522, 1
    %524 = vsyncpa [#allocation6], 1
    %525 = vsyncpa [#allocation4], 1
    %s526 = scalar_lea.sflag [#allocation4], 1
    %527 = vsyncpa %s526, 1

// kernel: _forward_impl.1
$region0: #{_forward_impl.1}
  #allocation0 [shape = 'u32[]', space=smem, size = 0x4, offset = 0x4, fixed_abs, tag = 'smem constant byte address 0x4 - core index']
  #allocation1 [shape = 'u32[144,128]{1,0:T(1,128)}', space=vmem, size = 0x12000, scoped, tag = 'internal scratch']
  %s0 = inlined_call_operand.hbm [shape: f32[256,128], index: 0, kind: input, shape index: {}]
  %s1 = inlined_call_operand.hbm [shape: bf16[128,128], index: 1, kind: input, shape index: {}]
  %s2 = inlined_call_operand.vmem [shape: f32[1,128], index: 2, kind: input, shape index: {}]
  %s3 = inlined_call_operand.vmem [shape: f32[1,128], index: 3, kind: input, shape index: {}]
  %s4 = inlined_call_operand.hbm [shape: f32[256,128], index: 4, kind: input, shape index: {}]
  %s5 = inlined_call_operand.hbm [shape: f32[256,128], index: 5, kind: output, shape index: {}]
  %s6 = sld [smem:[#allocation0]]
  $region65: #{_forward_impl.1} parent=0
    _
  %s8 = ssub.s32 1, %s6
  %s9 = scalar_select 0, %s8, %s6
  $region1: #{_forward_impl.1} parent=0
    #allocation2 [shape = 'u8[65536]{0}', space=vmem, size = 0x10000, scoped, tag = 'input window, operand 0']
    #allocation3 [shape = 's32[2]{0}', space=sflag, size = 0x8, scoped, tag = 'scoped memory for _forward_impl.1']
    #allocation4 [shape = 's32[2]{0}', space=sflag, size = 0x8, scoped, tag = 'scoped memory for _forward_impl.1']
    #allocation5 [shape = 'u8[32768]{0}', space=vmem, size = 0x8000, scoped, tag = 'input window, operand 1, single buffered']
    #allocation6 [shape = 's32[1]{0}', space=sflag, size = 0x4, scoped, tag = 'scoped memory for _forward_impl.1']
    #allocation7 [shape = 'u8[65536]{0}', space=vmem, size = 0x10000, scoped, tag = 'input window, operand 4']
    #allocation8 [shape = 'u8[65536]{0}', space=vmem, size = 0x10000, scoped, tag = 'output window, operand 0']
    %10 = vsyncpa [#allocation3], 0
    %s11 = scalar_lea.sflag [#allocation3], 1
    %12 = vsyncpa %s11, 0
    %13 = vsyncpa [#allocation6], 0
    %14 = vsyncpa [#allocation4], 0
    %s15 = scalar_lea.sflag [#allocation4], 1
    %16 = vsyncpa %s15, 0
    loop: start=0, step=1, limit=6
    $region2: #{_forward_impl.1} parent=1 // loop_pre_header
      _
    $region3: #{_forward_impl.1} parent=1 // loop_header
      %s18 = sphi 0, %s22
      %p19 = scmp.ge.s32.totalorder %s18, 6
      %s28 = sphi 0, %s30
      %s31 = sphi 0, %s28
      %s32 = sphi 0, %s31
      %s48 = sphi 0, %s32
      %s52 = sphi 0, %s52
      %s54 = sphi 0, %s52
      %s55 = sphi 0, %s54
      %s69 = sphi 0, %s55
      %s73 = sphi 0, %s73
      %s75 = sphi 0, %s73
      %s76 = sphi 0, %s75
      %s90 = sphi 0, %s76
      %s94 = sphi 0, %s94
      %s96 = sphi 0, %s94
      %s97 = sphi 0, %s96
      %s111 = sphi 0, %s97
      %s117 = sphi 0, %s119
      %s120 = sphi 0, %s117
      %s121 = sphi 0, %s120
      %s137 = sphi 0, %s121
      %s143 = sphi 0, %s145
      %s146 = sphi 0, %s143
      %s147 = sphi 0, %s146
      %s163 = sphi 0, %s147
    $region4: #{_forward_impl.1} parent=1 // loop_header_branch
      %21 = sbr.rel (%p19) target = $region8
    $region5: #{_forward_impl.1} parent=1 // loop_body
      %s23 = ssub.s32 %s18, 1
      %s24 = ssub.s32 %s18, 2
      %s25 = sadd.s32 %s18, 1
      %s26 = ssub.s32 %s18, %s25
      %p27 = scmp.eq.s32.totalorder %s26, 0
      %s29 = sadd.s32 %s28, 1
      %s30 = scalar_select %p27, %s28, %s29
      %p33 = pneg %p27
      %p34 = scmp.eq.s32.totalorder %s18, 3
      %p35 = por %p33, %p34
      %p36 = scmp.ne.s32.totalorder %s28, %s31
      %p37 = scmp.eq.s32.totalorder %s18, 0
      %p38 = por %p36, %p37
      %p39 = scmp.ne.s32.totalorder %s28, %s31
      %p40 = scmp.eq.s32.totalorder %s23, 3
      %p41 = por %p39, %p40
      %p42 = scmp.ne.s32.totalorder %s31, %s32
      %p43 = scmp.eq.s32.totalorder %s23, 0
      %p44 = por %p42, %p43
      %p45 = scmp.ne.s32.totalorder %s31, %s32
      %p46 = scmp.eq.s32.totalorder %s24, 3
      %p47 = por %p45, %p46
      %p49 = scmp.ne.s32.totalorder %s32, %s48
      %p50 = scmp.eq.s32.totalorder %s24, 0
      %p51 = por %p49, %p50
      %s53 = sadd.s32 %s52, 1
      %p56 = scmp.eq.s32.totalorder %s18, 3
      %p57 = scmp.ne.s32.totalorder %s52, %s54
      %p58 = scmp.eq.s32.totalorder %s18, 0
      %p59 = por %p57, %p58
      %p60 = scmp.ne.s32.totalorder %s52, %s54
      %p61 = scmp.eq.s32.totalorder %s23, 3
      %p62 = por %p60, %p61
      %p63 = scmp.ne.s32.totalorder %s54, %s55
      %p64 = scmp.eq.s32.totalorder %s23, 0
      %p65 = por %p63, %p64
      %p66 = scmp.ne.s32.totalorder %s54, %s55
      %p67 = scmp.eq.s32.totalorder %s24, 3
      %p68 = por %p66, %p67
      %p70 = scmp.ne.s32.totalorder %s55, %s69
      %p71 = scmp.eq.s32.totalorder %s24, 0
      %p72 = por %p70, %p71
      %s74 = sadd.s32 %s73, 1
      %p77 = scmp.eq.s32.totalorder %s18, 3
      %p78 = scmp.ne.s32.totalorder %s73, %s75
      %p79 = scmp.eq.s32.totalorder %s18, 0
      %p80 = por %p78, %p79
      %p81 = scmp.ne.s32.totalorder %s73, %s75
      %p82 = scmp.eq.s32.totalorder %s23, 3
      %p83 = por %p81, %p82
      %p84 = scmp.ne.s32.totalorder %s75, %s76
      %p85 = scmp.eq.s32.totalorder %s23, 0
      %p86 = por %p84, %p85
      %p87 = scmp.ne.s32.totalorder %s75, %s76
      %p88 = scmp.eq.s32.totalorder %s24, 3
      %p89 = por %p87, %p88
      %p91 = scmp.ne.s32.totalorder %s76, %s90
      %p92 = scmp.eq.s32.totalorder %s24, 0
      %p93 = por %p91, %p92
      %s95 = sadd.s32 %s94, 1
      %p98 = scmp.eq.s32.totalorder %s18, 3
      %p99 = scmp.ne.s32.totalorder %s94, %s96
      %p100 = scmp.eq.s32.totalorder %s18, 0
      %p101 = por %p99, %p100
      %p102 = scmp.ne.s32.totalorder %s94, %s96
      %p103 = scmp.eq.s32.totalorder %s23, 3
      %p104 = por %p102, %p103
      %p105 = scmp.ne.s32.totalorder %s96, %s97
      %p106 = scmp.eq.s32.totalorder %s23, 0
      %p107 = por %p105, %p106
      %p108 = scmp.ne.s32.totalorder %s96, %s97
      %p109 = scmp.eq.s32.totalorder %s24, 3
      %p110 = por %p108, %p109
      %p112 = scmp.ne.s32.totalorder %s97, %s111
      %p113 = scmp.eq.s32.totalorder %s24, 0
      %p114 = por %p112, %p113
      %s115 = ssub.s32 %s18, %s25
      %p116 = scmp.eq.s32.totalorder %s115, 0
      %s118 = sadd.s32 %s117, 1
      %s119 = scalar_select %p116, %s117, %s118
      %p122 = pneg %p116
      %p123 = scmp.eq.s32.totalorder %s18, 3
      %p124 = por %p122, %p123
      %p125 = scmp.ne.s32.totalorder %s117, %s120
      %p126 = scmp.eq.s32.totalorder %s18, 0
      %p127 = por %p125, %p126
      %p128 = scmp.ne.s32.totalorder %s117, %s120
      %p129 = scmp.eq.s32.totalorder %s23, 3
      %p130 = por %p128, %p129
      %p131 = scmp.ne.s32.totalorder %s120, %s121
      %p132 = scmp.eq.s32.totalorder %s23, 0
      %p133 = por %p131, %p132
      %p134 = scmp.ne.s32.totalorder %s120, %s121
      %p135 = scmp.eq.s32.totalorder %s24, 3
      %p136 = por %p134, %p135
      %p138 = scmp.ne.s32.totalorder %s121, %s137
      %p139 = scmp.eq.s32.totalorder %s24, 0
      %p140 = por %p138, %p139
      %s141 = ssub.s32 %s18, %s25
      %p142 = scmp.eq.s32.totalorder %s141, 0
      %s144 = sadd.s32 %s143, 1
      %s145 = scalar_select %p142, %s143, %s144
      %p148 = pneg %p142
      %p149 = scmp.eq.s32.totalorder %s18, 3
      %p150 = por %p148, %p149
      %p151 = scmp.ne.s32.totalorder %s143, %s146
      %p152 = scmp.eq.s32.totalorder %s18, 0
      %p153 = por %p151, %p152
      %p154 = scmp.ne.s32.totalorder %s143, %s146
      %p155 = scmp.eq.s32.totalorder %s23, 3
      %p156 = por %p154, %p155
      %p157 = scmp.ne.s32.totalorder %s146, %s147
      %p158 = scmp.eq.s32.totalorder %s23, 0
      %p159 = por %p157, %p158
      %p160 = scmp.ne.s32.totalorder %s146, %s147
      %p161 = scmp.eq.s32.totalorder %s24, 3
      %p162 = por %p160, %p161
      %p164 = scmp.ne.s32.totalorder %s147, %s163
      %p165 = scmp.eq.s32.totalorder %s24, 0
      %p166 = por %p164, %p165
      %p167 = scmp.le.s32.totalorder 1, %s18
      %p168 = scmp.lt.s32.totalorder %s18, 5
      %p169 = pnand %p167, %p168
      %p170 = pneg %p169
      // Predicated region
      $region9: #{_forward_impl.1} parent=5 // pred_check
        _
      $region10: #{_forward_impl.1} parent=5 // pred_check_branch
        %172 = sbr.rel (%p169) target = $region12
      $region11: #{_forward_impl.1} parent=5 // pred_region
        %s173 = ssub.s32 %s18, 1
        // Predicated region
        $region13: #{_forward_impl.1} parent=11 // pred_check
          %p174 = pneg %p65
        $region14: #{_forward_impl.1} parent=11 // pred_check_branch
          %176 = sbr.rel (%p174) target = $region16
        $region15: #{_forward_impl.1} parent=11 // pred_region
          %s178 = ssub.s32 1024, 1024
          %179 = vsyncadd [#allocation6], %s178
          %s180 = sshll.u32 [#allocation5], 4
          %s181 = int_to_ptr.vmem [resolvable:$true] %s180
          %186 = dma.hbm_to_vmem [thread:$0]  %s1, 1024, %s181, [#allocation6], 64, 64, 4
        $region16: #{_forward_impl.1} parent=11 // pred_fallthru
          _
        // Predicated region
        $region17: #{_forward_impl.1} parent=11 // pred_check
          %p187 = pneg %p86
        $region18: #{_forward_impl.1} parent=11 // pred_check_branch
          %189 = sbr.rel (%p187) target = $region20
        $region19: #{_forward_impl.1} parent=11 // pred_region
          _
        $region20: #{_forward_impl.1} parent=11 // pred_fallthru
          _
        // Predicated region
        $region21: #{_forward_impl.1} parent=11 // pred_check
          %p190 = pneg %p107
        $region22: #{_forward_impl.1} parent=11 // pred_check_branch
          %192 = sbr.rel (%p190) target = $region24
        $region23: #{_forward_impl.1} parent=11 // pred_region
          _
        $region24: #{_forward_impl.1} parent=11 // pred_fallthru
          _
      $region12: #{_forward_impl.1} parent=5 // pred_fallthru
        _
      %p193 = scmp.lt.s32.totalorder %s18, 4
      // Predicated region
      $region25: #{_forward_impl.1} parent=5 // pred_check
        %p194 = pneg %p193
      $region26: #{_forward_impl.1} parent=5 // pred_check_branch
        %196 = sbr.rel (%p194) target = $region28
      $region27: #{_forward_impl.1} parent=5 // pred_region
        // Predicated region
        $region29: #{_forward_impl.1} parent=27 // pred_check
          %p197 = pneg %p38
        $region30: #{_forward_impl.1} parent=27 // pred_check_branch
          %199 = sbr.rel (%p197) target = $region32
        $region31: #{_forward_impl.1} parent=27 // pred_region
          %s200 = sand.u32 %s18, 1
          %s201 = scalar_lea.sflag [#allocation3], %s200
          %s202 = sand.u32 %s28, 1
          %s203 = smul.addr %s202, 64
          %s204 = scalar_lea.vmem [#allocation2], %s203
          %s205 = smul.u32 8, %s18
          %s207 = ssub.s32 1024, 1024
          %208 = vsyncadd %s201, %s207
          %s209 = smul.addr %s205, 128
          %s210 = scalar_lea.hbm %s0, %s209
          %s211 = sshll.u32 %s204, 4
          %s212 = int_to_ptr.vmem [resolvable:$true] %s211
          %217 = dma.hbm_to_vmem [thread:$0]  %s210, 1024, %s212, %s201, 128, 128, 8
        $region32: #{_forward_impl.1} parent=27 // pred_fallthru
          _
        // Predicated region
        $region33: #{_forward_impl.1} parent=27 // pred_check
          %p218 = pneg %p127
        $region34: #{_forward_impl.1} parent=27 // pred_check_branch
          %220 = sbr.rel (%p218) target = $region36
        $region35: #{_forward_impl.1} parent=27 // pred_region
          %s221 = sand.u32 %s18, 1
          %s222 = scalar_lea.sflag [#allocation3], %s221
          %s223 = sand.u32 %s117, 1
          %s224 = smul.addr %s223, 64
          %s225 = scalar_lea.vmem [#allocation7], %s224
          %s226 = smul.u32 8, %s18
          %s228 = ssub.s32 1024, 1024
          %229 = vsyncadd %s222, %s228
          %s230 = smul.addr %s226, 128
          %s231 = scalar_lea.hbm %s4, %s230
          %s232 = sshll.u32 %s225, 4
          %s233 = int_to_ptr.vmem [resolvable:$true] %s232
          %238 = dma.hbm_to_vmem [thread:$0]  %s231, 1024, %s233, %s222, 128, 128, 8
        $region36: #{_forward_impl.1} parent=27 // pred_fallthru
          _
      $region28: #{_forward_impl.1} parent=5 // pred_fallthru
        _
      %p239 = scmp.le.s32.totalorder 1, %s18
      %p240 = scmp.lt.s32.totalorder %s18, 5
      %p241 = pnand %p239, %p240
      %p242 = pneg %p241
      // Predicated region
      $region37: #{_forward_impl.1} parent=5 // pred_check
        _
      $region38: #{_forward_impl.1} parent=5 // pred_check_branch
        %244 = sbr.rel (%p241) target = $region40
      $region39: #{_forward_impl.1} parent=5 // pred_region
        %s245 = ssub.s32 %s18, 1
        %s246 = sand.u32 %s23, 1
        %s247 = scalar_lea.sflag [#allocation3], %s246
        %s248 = sand.u32 %s31, 1
        %s249 = smul.addr %s248, 64
        %s250 = scalar_lea.vmem [#allocation2], %s249
        // Predicated region
        $region41: #{_forward_impl.1} parent=39 // pred_check
          %p251 = pneg %p44
        $region42: #{_forward_impl.1} parent=39 // pred_check_branch
          %253 = sbr.rel (%p251) target = $region44
        $region43: #{_forward_impl.1} parent=39 // pred_region
          %254 = dma.done %s247, 1024
        $region44: #{_forward_impl.1} parent=39 // pred_fallthru
          _
        // Predicated region
        $region45: #{_forward_impl.1} parent=39 // pred_check
          %p255 = pneg %p65
        $region46: #{_forward_impl.1} parent=39 // pred_check_branch
          %257 = sbr.rel (%p255) target = $region48
        $region47: #{_forward_impl.1} parent=39 // pred_region
          %258 = dma.done [#allocation6], 1024
        $region48: #{_forward_impl.1} parent=39 // pred_fallthru
          _
        %s259 = sand.u32 %s23, 1
        %s260 = scalar_lea.sflag [#allocation3], %s259
        %s261 = sand.u32 %s120, 1
        %s262 = smul.addr %s261, 64
        %s263 = scalar_lea.vmem [#allocation7], %s262
        // Predicated region
        $region49: #{_forward_impl.1} parent=39 // pred_check
          %p264 = pneg %p133
        $region50: #{_forward_impl.1} parent=39 // pred_check_branch
          %266 = sbr.rel (%p264) target = $region52
        $region51: #{_forward_impl.1} parent=39 // pred_region
          %267 = dma.done %s260, 1024
        $region52: #{_forward_impl.1} parent=39 // pred_fallthru
          _
        %s268 = sand.u32 %s23, 1
        %s269 = scalar_lea.sflag [#allocation3], %s268
        %s270 = sand.u32 %s31, 1
        %s271 = smul.addr %s270, 64
        %s272 = scalar_lea.vmem [#allocation2], %s271
        %p273 = pneg %p44
        %p274 = pneg %p41
        %p275 = pneg %p65
        %p276 = pneg %p62
        %p277 = pneg %p86
        %p278 = pneg %p83
        %p279 = pneg %p107
        %p280 = pneg %p104
        %s281 = sand.u32 %s23, 1
        %s282 = scalar_lea.sflag [#allocation3], %s281
        %s283 = sand.u32 %s120, 1
        %s284 = smul.addr %s283, 64
        %s285 = scalar_lea.vmem [#allocation7], %s284
        %p286 = pneg %p133
        %p287 = pneg %p130
        %p288 = pneg %p159
        %p289 = pneg %p156
        %s290 = sand.u32 %s146, 1
        %s291 = scalar_lea.sflag [#allocation4], %s290
        %s292 = sand.u32 %s146, 1
        %s293 = smul.addr %s292, 64
        %s294 = scalar_lea.vmem [#allocation8], %s293
        %s295 = smul.u32 8, %s23
        %s296 = smul.u32 8, %s23
        %s297 = smul.u32 8, %s23
        %v299 = vld [vmem:[%s250] sm:$0xff]
        %v300 = vld [vmem:[%s250 + $0x8] sm:$0xff]
        %v301 = vld [vmem:[%s250 + $0x10] sm:$0xff]
        %v302 = vld [vmem:[%s250 + $0x18] sm:$0xff]
        %v303 = vld [vmem:[%s250 + $0x20] sm:$0xff]
        %v304 = vld [vmem:[%s250 + $0x28] sm:$0xff]
        %v305 = vld [vmem:[%s250 + $0x30] sm:$0xff]
        %v306 = vld [vmem:[%s250 + $0x38] sm:$0xff]
        %v307 = vpack.c.bf16 %v300, %v299
        %v308 = vpack.c.bf16 %v302, %v301
        %v309 = vpack.c.bf16 %v304, %v303
        %v310 = vpack.c.bf16 %v306, %v305
        %v311 = vld [vmem:[#allocation5] sm:$0xf]
        %v312 = vld [vmem:[#allocation5 + $0x4] sm:$0xf]
        %v313 = vld [vmem:[#allocation5 + $0x8] sm:$0xf]
        %v314 = vld [vmem:[#allocation5 + $0xc] sm:$0xf]
        %v315 = vld [vmem:[#allocation5 + $0x10] sm:$0xf]
        %v316 = vld [vmem:[#allocation5 + $0x14] sm:$0xf]
        %v317 = vld [vmem:[#allocation5 + $0x18] sm:$0xf]
        %v318 = vld [vmem:[#allocation5 + $0x1c] sm:$0xf]
        %v319 = vld [vmem:[#allocation5 + $0x20] sm:$0xf]
        %v320 = vld [vmem:[#allocation5 + $0x24] sm:$0xf]
        %v321 = vld [vmem:[#allocation5 + $0x28] sm:$0xf]
        %v322 = vld [vmem:[#allocation5 + $0x2c] sm:$0xf]
        %v323 = vld [vmem:[#allocation5 + $0x30] sm:$0xf]
        %v324 = vld [vmem:[#allocation5 + $0x34] sm:$0xf]
        %v325 = vld [vmem:[#allocation5 + $0x38] sm:$0xf]
        %v326 = vld [vmem:[#allocation5 + $0x3c] sm:$0xf]
        %v327 = vld [vmem:[%s2] sm:$0x1]
        %v329 = vlaneseq
        %v330 = vshrl.u32 %v329, 7
        %v331 = vsub.s32 0, %v330
        %v332 = vrot.slane %v327, %v331
        %v350 = vunpack.c.l.b16 %v311
        %v351 = vunpack.c.l.b16 %v312
        %v352 = vunpack.c.l.b16 %v313
        %v353 = vunpack.c.l.b16 %v314
        %v354 = vunpack.c.l.b16 %v315
        %v355 = vunpack.c.l.b16 %v316
        %v356 = vunpack.c.l.b16 %v317
        %v357 = vunpack.c.l.b16 %v318
        %v358 = vunpack.c.l.b16 %v319
        %v359 = vunpack.c.l.b16 %v320
        %v360 = vunpack.c.l.b16 %v321
        %v361 = vunpack.c.l.b16 %v322
        %v362 = vunpack.c.l.b16 %v323
        %v363 = vunpack.c.l.b16 %v324
        %v364 = vunpack.c.l.b16 %v325
        %v365 = vunpack.c.l.b16 %v326
        %v366 = vpack.c.b16 %v351, %v350
        %v367 = vpack.c.b16 %v353, %v352
        %v368 = vpack.c.b16 %v355, %v354
        %v369 = vpack.c.b16 %v357, %v356
        %v370 = vpack.c.b16 %v359, %v358
        %v371 = vpack.c.b16 %v361, %v360
        %v372 = vpack.c.b16 %v363, %v362
        %v373 = vpack.c.b16 %v365, %v364
        %382 = vmatprep.subr.bf16.mxu0 0
        %383 = vmatpush1.bf16.msra.mxu0 %v366
        %384 = vmatprep.subr.bf16.mxu0 0
        %385 = vmatpush1.bf16.msra.mxu0 %v367
        %386 = vmatprep.subr.bf16.mxu0 0
        %387 = vmatpush1.bf16.msra.mxu0 %v368
        %388 = vmatprep.subr.bf16.mxu0 0
        %389 = vmatpush1.bf16.msra.mxu0 %v369
        %390 = vmatprep.subr.bf16.mxu0 0
        %391 = vmatpush1.bf16.msra.mxu0 %v370
        %392 = vmatprep.subr.bf16.mxu0 0
        %393 = vmatpush1.bf16.msra.mxu0 %v371
        %394 = vmatprep.subr.bf16.mxu0 0
        %395 = vmatpush1.bf16.msra.mxu0 %v372
        %396 = vmatprep.subr.bf16.mxu0 0
        %397 = vmatpush1.bf16.msra.mxu0 %v373
        %398 = vmatprep.subr.bf16.mxu0 0
        %399 = vmatpush1.bf16.msra.mxu0 0
        %400 = vmatprep.subr.bf16.mxu0 0
        %401 = vmatpush1.bf16.msra.mxu0 0
        %402 = vmatprep.subr.bf16.mxu0 0
        %403 = vmatpush1.bf16.msra.mxu0 0
        %404 = vmatprep.subr.bf16.mxu0 0
        %405 = vmatpush1.bf16.msra.mxu0 0
        %406 = vmatprep.subr.bf16.mxu0 0
        %407 = vmatpush1.bf16.msra.mxu0 0
        %408 = vmatprep.subr.bf16.mxu0 0
        %409 = vmatpush1.bf16.msra.mxu0 0
        %410 = vmatprep.subr.bf16.mxu0 0
        %411 = vmatpush1.bf16.msra.mxu0 0
        %412 = vmatprep.subr.bf16.mxu0 0
        %413 = vmatpush1.bf16.msra.mxu0 0
        %414 = vmatprep.mubr.bf16.mxu0 0
        %415 = vmatmul.mubr.bf16.gmra.mrb[0].mxu0 %v307
        %v416 = vpop.f32.mrb[0].mxu0
        %v417 = vadd.f32 %v332, %v416
        %v418 = vpop.f32.mrb[0].mxu0
        %v419 = vpop.f32.mrb[0].mxu0
        %v420 = vadd.f32 %v332, %v419
        %v421 = vpop.f32.mrb[0].mxu0
        %422 = vmatprep.mubr.bf16.mxu0 0
        %423 = vmatmul.mubr.bf16.gmra.mrb[0].mxu0 %v308
        %v424 = vpop.f32.mrb[0].mxu0
        %v425 = vadd.f32 %v332, %v424
        %v426 = vpop.f32.mrb[0].mxu0
        %v427 = vpop.f32.mrb[0].mxu0
        %v428 = vadd.f32 %v332, %v427
        %v429 = vpop.f32.mrb[0].mxu0
        %430 = vmatprep.mubr.bf16.mxu0 0
        %431 = vmatmul.mubr.bf16.gmra.mrb[0].mxu0 %v309
        %v432 = vpop.f32.mrb[0].mxu0
        %v433 = vadd.f32 %v332, %v432
        %v434 = vpop.f32.mrb[0].mxu0
        %v435 = vpop.f32.mrb[0].mxu0
        %v436 = vadd.f32 %v332, %v435
        %v437 = vpop.f32.mrb[0].mxu0
        %438 = vmatprep.mubr.bf16.mxu0 0
        %439 = vmatmul.mubr.bf16.gmra.mrb[0].mxu0 %v310
        %v440 = vpop.f32.mrb[0].mxu0
        %v441 = vadd.f32 %v332, %v440
        %v442 = vpop.f32.mrb[0].mxu0
        %v443 = vpop.f32.mrb[0].mxu0
        %v444 = vadd.f32 %v332, %v443
        %v445 = vpop.f32.mrb[0].mxu0
        %446 = vdwg.mxu0
        %v447 = vld [vmem:[%s3] sm:$0x1]
        %v448 = vld [vmem:[%s263] sm:$0xff]
        %v449 = vld [vmem:[%s263 + $0x8] sm:$0xff]
        %v450 = vld [vmem:[%s263 + $0x10] sm:$0xff]
        %v451 = vld [vmem:[%s263 + $0x18] sm:$0xff]
        %v452 = vld [vmem:[%s263 + $0x20] sm:$0xff]
        %v453 = vld [vmem:[%s263 + $0x28] sm:$0xff]
        %v454 = vld [vmem:[%s263 + $0x30] sm:$0xff]
        %v455 = vld [vmem:[%s263 + $0x38] sm:$0xff]
        %v457 = vlaneseq
        %v458 = vshrl.u32 %v457, 7
        %v459 = vsub.s32 0, %v458
        %v460 = vrot.slane %v447, %v459
        %v462 = vmul.f32 %v460, %v448
        %v463 = vmul.f32 %v460, %v449
        %v464 = vmul.f32 %v460, %v450
        %v465 = vmul.f32 %v460, %v451
        %v466 = vmul.f32 %v460, %v452
        %v467 = vmul.f32 %v460, %v453
        %v468 = vmul.f32 %v460, %v454
        %v469 = vmul.f32 %v460, %v455
        %v470 = vsub.f32 %v417, %v462
        %v471 = vsub.f32 %v420, %v463
        %v472 = vsub.f32 %v425, %v464
        %v473 = vsub.f32 %v428, %v465
        %v474 = vsub.f32 %v433, %v466
        %v475 = vsub.f32 %v436, %v467
        %v476 = vsub.f32 %v441, %v468
        %v477 = vsub.f32 %v444, %v469
        %478 = vst [vmem:[%s294] sm:$0xff] %v470
        %479 = vst [vmem:[%s294 + $0x8] sm:$0xff] %v471
        %480 = vst [vmem:[%s294 + $0x10] sm:$0xff] %v472
        %481 = vst [vmem:[%s294 + $0x18] sm:$0xff] %v473
        %482 = vst [vmem:[%s294 + $0x20] sm:$0xff] %v474
        %483 = vst [vmem:[%s294 + $0x28] sm:$0xff] %v475
        %484 = vst [vmem:[%s294 + $0x30] sm:$0xff] %v476
        %485 = vst [vmem:[%s294 + $0x38] sm:$0xff] %v477
        %s486 = sand.u32 %s146, 1
        %s487 = scalar_lea.sflag [#allocation4], %s486
        %s488 = sand.u32 %s146, 1
        %s489 = smul.addr %s488, 64
        %s490 = scalar_lea.vmem [#allocation8], %s489
        // Predicated region
        $region53: #{_forward_impl.1} parent=39 // pred_check
          %p491 = pneg %p156
        $region54: #{_forward_impl.1} parent=39 // pred_check_branch
          %493 = sbr.rel (%p491) target = $region56
        $region55: #{_forward_impl.1} parent=39 // pred_region
          %s494 = smul.u32 8, %s23
          %s496 = ssub.s32 1024, 1024
          %497 = vsyncadd %s487, %s496
          %s498 = smul.addr %s494, 128
          %s499 = scalar_lea.hbm %s5, %s498
          %s500 = sshll.u32 %s490, 4
          %s501 = int_to_ptr.vmem [resolvable:$true] %s500
          %506 = dma.vmem_to_hbm [thread:$0]  %s501, 1024, %s499, %s487, 128, 128, 8
        $region56: #{_forward_impl.1} parent=39 // pred_fallthru
          _
      $region40: #{_forward_impl.1} parent=5 // pred_fallthru
        _
      %p507 = scmp.le.s32.totalorder 2, %s18
      // Predicated region
      $region57: #{_forward_impl.1} parent=5 // pred_check
        %p508 = pneg %p507
      $region58: #{_forward_impl.1} parent=5 // pred_check_branch
        %510 = sbr.rel (%p508) target = $region60
      $region59: #{_forward_impl.1} parent=5 // pred_region
        %s511 = ssub.s32 %s18, 2
        // Predicated region
        $region61: #{_forward_impl.1} parent=59 // pred_check
          %p512 = pneg %p162
        $region62: #{_forward_impl.1} parent=59 // pred_check_branch
          %514 = sbr.rel (%p512) target = $region64
        $region63: #{_forward_impl.1} parent=59 // pred_region
          %s515 = sand.u32 %s147, 1
          %s516 = scalar_lea.sflag [#allocation4], %s515
          %s517 = sand.u32 %s147, 1
          %s518 = smul.addr %s517, 64
          %s519 = scalar_lea.vmem [#allocation8], %s518
          %520 = dma.done %s516, 1024
        $region64: #{_forward_impl.1} parent=59 // pred_fallthru
          _
      $region60: #{_forward_impl.1} parent=5 // pred_fallthru
        _
    $region6: #{_forward_impl.1} parent=1 // loop_footer
      %s22 = sadd.s32 1, %s18
    $region7: #{_forward_impl.1} parent=1 // loop_footer_branch
      %17 = sbr.rel target = $region3
    $region8: #{_forward_impl.1} parent=1 // loop_exit
      _
    %521 = vsyncpa [#allocation3], 1
    %s522 = scalar_lea.sflag [#allocation3], 1
    %523 = vsyncpa %s522, 1
    %524 = vsyncpa [#allocation6], 1
    %525 = vsyncpa [#allocation4], 1
    %s526 = scalar_lea.sflag [#allocation4], 1
    %527 = vsyncpa %s526, 1

</llo_original>
